<compile_context>
chip_gen: v7x
topology: tpu7x:2x2x1
jax: 0.10.0
libtpu: 0.0.40
codegen_flags: <defaults>
</compile_context>

<pallas_src>
import math
import jax
import jax.numpy as jnp
from jax.experimental import pallas as pl
from jax.experimental.pallas import tpu as pltpu


def _pair(v):
    return tuple(v) if isinstance(v, (tuple, list)) else (v, v)


def _ceil_to(x, m):
    return ((x + m - 1) // m) * m


def _vmem_capacity_bytes():
    try:
        return int(pltpu.get_tpu_info().vmem_capacity_bytes)
    except Exception:
        return 64 << 20            # conservative fallback (v7x physical VMEM)


def _pick_tile(dim, cap):
    """Largest multiple-of-128 tile <= cap whose zero-padding waste is near-minimal."""
    cands = [(t, _ceil_to(dim, t)) for t in range(128, cap + 1, 128)]
    min_waste = min(p - dim for _, p in cands)
    allow = min_waste + dim // 64                       # ~1.5% slack favors big tiles
    t, pad = max(((t, p) for t, p in cands if p - dim <= allow), key=lambda c: c[0])
    return t, pad


def _select_tiling(P, Rg, Cog, vmem_budget):
    """Pick (p_tile, P_pad, rg_tile, Rg_pad, Cog_pad, weight_resident)."""
    Cog_pad = _ceil_to(Cog, 128) if Cog >= 128 else _ceil_to(Cog, 16)
    big = vmem_budget >= (64 << 20)
    p_cap = 4096 if big else 2048
    rg_cap = 2048 if big else 1024
    target = (vmem_budget * 4) // 5

    while True:
        P128 = _ceil_to(P, 128)
        if P128 <= p_cap:
            p_tile, P_pad = P128, P128
        else:
            p_tile, P_pad = _pick_tile(P, p_cap)
        if Rg <= min(2048, max(rg_cap, 256)):
            rg_tile, Rg_pad = Rg, Rg                    # single reduction step
        else:
            rg_tile, Rg_pad = _pick_tile(Rg, rg_cap)    # multiple of 128
        w_resident = (2 * Cog_pad * Rg_pad * 2) <= target // 2
        need = (2 * rg_tile * p_tile * 2                                    # cols bf16 x2buf
                + 2 * Cog_pad * (Rg_pad if w_resident else rg_tile) * 2     # weight bf16
                + 2 * Cog_pad * p_tile * 4                                  # out f32 x2buf
                + 2 * Cog_pad * 128 * 4)                                    # bias
        if need <= target or (p_cap <= 512 and rg_cap <= 256):
            return p_tile, P_pad, rg_tile, Rg_pad, Cog_pad, w_resident
        if p_cap > 512:
            p_cap //= 2
        else:
            rg_cap = max(256, rg_cap // 2)


# ----------------------------------------------------------------------------
# Pallas kernel: grouped matmul over modulated-deformable im2col columns.
#   cols: (N, G, Rg_pad, P_pad)   bf16
#   w:    (G, Cog_pad, Rg_pad)    bf16   (or (G, Cog_pad, rg_tile) blocks if streamed)
#   b:    (G, Cog_pad, 1)         f32
#   out:  (N, G, Cog_pad, P_pad)  f32    (accumulated in place, bias on last k step)
# grid = (N, G, P_tiles, K_tiles); the Rg reduction axis is innermost ("arbitrary").
# ----------------------------------------------------------------------------
def _dcn_matmul_pallas(cols, w, b, *, p_tile, rg_tile, weight_resident, vmem_limit):
    N, G, Rg_pad, P_pad = cols.shape
    Cog_pad = w.shape[1]
    n_p = P_pad // p_tile
    n_k = Rg_pad // rg_tile
    if n_k > 1:
        assert rg_tile % 128 == 0

    def kernel(cols_ref, w_ref, b_ref, o_ref):
        k = pl.program_id(3)

        @pl.when(k == 0)
        def _():
            o_ref[...] = jnp.zeros_like(o_ref)

        if weight_resident:
            if n_k == 1:
                w_blk = w_ref[...]                          # (Cog_pad, Rg_pad)
            else:
                start = pl.multiple_of(k * rg_tile, 128)
                w_blk = w_ref[:, pl.ds(start, rg_tile)]     # resident weight, k-slice
        else:
            w_blk = w_ref[...]                              # streamed (Cog_pad, rg_tile)

        o_ref[...] += jnp.dot(w_blk, cols_ref[...],
                              preferred_element_type=jnp.float32)

        @pl.when(k == n_k - 1)
        def _():
            o_ref[...] += b_ref[...]                        # (Cog_pad, 1) lane-broadcast

    if weight_resident:
        w_spec = pl.BlockSpec((None, Cog_pad, Rg_pad), lambda n, g, p, k: (g, 0, 0))
    else:
        w_spec = pl.BlockSpec((None, Cog_pad, rg_tile), lambda n, g, p, k: (g, 0, k))

    cost = pl.CostEstimate(
        flops=2 * N * G * Cog_pad * Rg_pad * P_pad,
        transcendentals=0,
        bytes_accessed=int(cols.size * 2 + w.size * 2 + b.size * 4
                           + N * G * Cog_pad * P_pad * 4))

    return pl.pallas_call(
        kernel,
        out_shape=jax.ShapeDtypeStruct((N, G, Cog_pad, P_pad), jnp.float32),
        grid_spec=pltpu.PrefetchScalarGridSpec(
            num_scalar_prefetch=0,
            grid=(N, G, n_p, n_k),
            in_specs=[
                pl.BlockSpec((None, None, rg_tile, p_tile),
                             lambda n, g, p, k: (n, g, k, p)),
                w_spec,
                pl.BlockSpec((None, Cog_pad, 1), lambda n, g, p, k: (g, 0, 0)),
            ],
            out_specs=pl.BlockSpec((None, None, Cog_pad, p_tile),
                                   lambda n, g, p, k: (n, g, 0, p)),
        ),
        compiler_params=pltpu.CompilerParams(
            dimension_semantics=("parallel", "parallel", "parallel", "arbitrary"),
            vmem_limit_bytes=int(vmem_limit)),
        cost_estimate=cost,
    )(cols, w, b)


# ----------------------------------------------------------------------------
# XLA glue: decode offset/mask blob, bilinear-sample the 4 corners on a zero-padded
# image and pre-reduce them (with validity + modulation) into ONE bf16 im2col tensor,
# already zero-padded to the kernel's (Rg_pad, P_pad) tiling.
# ----------------------------------------------------------------------------
def _build_cols(x, offset_all, KH, KW, stride, padding, dilation,
                groups, deformable_groups, rg_pad, p_pad):
    N, Cin, H, W = x.shape
    sh, sw = stride
    ph_, pw_ = padding
    dh, dw = dilation
    DG = deformable_groups
    G = groups
    K = KH * KW
    Ho = (H + 2 * ph_ - (dh * (KH - 1) + 1)) // sh + 1
    Wo = (W + 2 * pw_ - (dw * (KW - 1) + 1)) // sw + 1
    assert offset_all.shape == (N, 3 * DG * K, Ho, Wo)

    # torch.chunk(offset_out, 3, dim=1); offset = cat(o1, o2); mask = sigmoid(o3)
    o1, o2, m = jnp.split(offset_all, 3, axis=1)
    off = jnp.concatenate([o1, o2], axis=1).reshape(N, DG, 2 * K, Ho, Wo)
    mask = jax.nn.sigmoid(m).reshape(N, DG, K, Ho, Wo)
    off_h = off[:, :, 0::2]                                   # (N, DG, K, Ho, Wo)
    off_w = off[:, :, 1::2]

    ki = (jnp.arange(K) // KW).astype(jnp.float32)
    kj = (jnp.arange(K) % KW).astype(jnp.float32)
    base_h = (jnp.arange(Ho) * sh - ph_).astype(jnp.float32)
    base_w = (jnp.arange(Wo) * sw - pw_).astype(jnp.float32)

    ph = (base_h[None, None, None, :, None]
          + (ki * dh)[None, None, :, None, None] + off_h)      # sample row
    pw = (base_w[None, None, None, None, :]
          + (kj * dw)[None, None, :, None, None] + off_w)      # sample col

    valid = (ph > -1.0) & (pw > -1.0) & (ph < H) & (pw < W)
    vm = valid.astype(jnp.float32) * mask                      # validity * modulation

    h0 = jnp.floor(ph)
    w0 = jnp.floor(pw)
    lh = ph - h0
    lw = pw - w0
    # Sample from a zero-padded image (1px halo): out-of-image corners read 0, which
    # matches the CUDA kernel skipping OOB corners.  Clip keeps invalid (weight==0)
    # samples in-bounds of the padded image.
    h0i = jnp.clip(h0.astype(jnp.int32) + 1, 0, H)
    w0i = jnp.clip(w0.astype(jnp.int32) + 1, 0, W)
    h1i = h0i + 1
    w1i = w0i + 1

    wt00 = (1.0 - lh) * (1.0 - lw) * vm
    wt01 = (1.0 - lh) * lw * vm
    wt10 = lh * (1.0 - lw) * vm
    wt11 = lh * lw * vm

    xp = jnp.pad(x, ((0, 0), (0, 0), (1, 1), (1, 1)))
    dg_of_c = jnp.arange(Cin) // (Cin // DG)                   # (Cin,)
    nn_idx = jnp.arange(N).reshape(N, 1, 1, 1, 1)
    cc_idx = jnp.arange(Cin).reshape(1, Cin, 1, 1, 1)

    # TODO(synk): the per-pixel data-dependent gather has no clean in-kernel Pallas
    #             TPU equivalent (no dynamic gather), so it stays in XLA; a single
    #             2x2-window lax.gather (1 gather instead of 4) is a possible upgrade.
    def corner(hi, wi, wt):
        hic = hi[:, dg_of_c]                                   # (N, Cin, K, Ho, Wo)
        wic = wi[:, dg_of_c]
        v = xp[nn_idx, cc_idx, hic, wic]
        return v * wt[:, dg_of_c]

    # Pre-reduce the 4 bilinear corners and cast to bf16 so only ONE im2col-sized
    # bf16 tensor is ever materialized in HBM.
    cols = (corner(h0i, w0i, wt00) + corner(h0i, w1i, wt01)
            + corner(h1i, w0i, wt10) + corner(h1i, w1i, wt11)).astype(jnp.bfloat16)

    Cin_g = Cin // G
    Rg = Cin_g * K
    P = Ho * Wo
    cols = cols.reshape(N, G, Rg, P)
    if rg_pad > Rg or p_pad > P:
        cols = jnp.pad(cols, ((0, 0), (0, 0), (0, rg_pad - Rg), (0, p_pad - P)))
    return cols, Ho, Wo


def modulated_deform_conv_forward(x, offset_all, weight, bias, stride, padding,
                                  dilation, groups, deformable_groups,
                                  use_pallas=True):
    N, Cin, H, W = x.shape
    Cout, Cin_g, KH, KW = weight.shape
    G = groups
    Cog = Cout // G
    sh, sw = stride
    ph_, pw_ = padding
    dh, dw = dilation
    Ho = (H + 2 * ph_ - (dh * (KH - 1) + 1)) // sh + 1
    Wo = (W + 2 * pw_ - (dw * (KW - 1) + 1)) // sw + 1
    Rg = Cin_g * KH * KW
    P = Ho * Wo

    if not use_pallas:
        # pure-JAX f32 reference (same sampling math) used for the correctness check
        cols, _, _ = _build_cols(x, offset_all, KH, KW, stride, padding, dilation,
                                 groups, deformable_groups, rg_pad=Rg, p_pad=P)
        w2 = weight.reshape(G, Cog, Rg).astype(jnp.float32)
        b2 = bias.reshape(G, Cog, 1).astype(jnp.float32)
        out = jnp.einsum('gor,ngrp->ngop', w2, cols.astype(jnp.float32),
                         precision=jax.lax.Precision.HIGHEST) + b2[None]
        return out.reshape(N, Cout, Ho, Wo)

    # ---- generation-aware VMEM budget & adaptive tiling ----
    vmem_budget = min((_vmem_capacity_bytes() * 3) // 4, 96 << 20)
    p_tile, P_pad, rg_tile, Rg_pad, Cog_pad, w_resident = _select_tiling(
        P, Rg, Cog, vmem_budget)

    # cols is built directly in bf16 and already zero-padded to the kernel tiling.
    cols, _, _ = _build_cols(x, offset_all, KH, KW, stride, padding, dilation,
                             groups, deformable_groups, rg_pad=Rg_pad, p_pad=P_pad)
    w_p = jnp.pad(weight.reshape(G, Cog, Rg),
                  ((0, 0), (0, Cog_pad - Cog), (0, Rg_pad - Rg))).astype(jnp.bfloat16)
    b_p = jnp.pad(bias.reshape(G, Cog, 1).astype(jnp.float32),
                  ((0, 0), (0, Cog_pad - Cog), (0, 0)))

    out = _dcn_matmul_pallas(cols, w_p, b_p, p_tile=p_tile, rg_tile=rg_tile,
                             weight_resident=w_resident, vmem_limit=vmem_budget)
    out = out[:, :, :Cog, :P]                     # no-op when padding is trivial
    return out.reshape(N, Cout, Ho, Wo)


# ----------------------------------------------------------------------------
# Module analogue of ModulatedDeformConvPack (deterministic param init)
# ----------------------------------------------------------------------------
class ModulatedDeformConvPackPallas:
    def __init__(self, in_channels, out_channels, kernel_size, stride, padding,
                 offset=None, dilation=1, groups=1, deformable_groups=1,
                 im2col_step=64, bias=False, lr_mult=0.1, key=None):
        if in_channels % groups != 0 or out_channels % groups != 0:
            raise ValueError("channels must be divisible by groups")
        self.in_channels = in_channels
        self.out_channels = out_channels
        self.kernel_size = _pair(kernel_size)
        self.stride = _pair(stride)
        self.padding = _pair(padding)
        self.dilation = _pair(dilation)
        self.groups = groups
        self.deformable_groups = deformable_groups
        self.im2col_step = im2col_step
        self.use_bias = True  # matches reference: bias always created & applied

        kh, kw = self.kernel_size
        fan_in = (in_channels // groups) * kh * kw
        # kaiming_uniform_(a=sqrt(5)) => bound = 1/sqrt(fan_in); bias uniform same bound
        bound = 1.0 / math.sqrt(fan_in)
        if key is None:
            key = jax.random.PRNGKey(0)
        wkey, bkey = jax.random.split(key)
        self.weight = jax.random.uniform(
            wkey, (out_channels, in_channels // groups, kh, kw),
            minval=-bound, maxval=bound, dtype=jnp.float32)
        self.bias = jax.random.uniform(
            bkey, (out_channels,), minval=-bound, maxval=bound, dtype=jnp.float32)

        self.offset = offset
        assert self.offset is not None
        assert self.offset.shape[1] == self.deformable_groups * 3 * kh * kw
        # TODO(synk): original forward calls ipdb.set_trace() (debugger artifact) — omitted.

    def __call__(self, x, use_pallas=True):
        return modulated_deform_conv_forward(
            x, self.offset, self.weight, self.bias, self.stride, self.padding,
            self.dilation, self.groups, self.deformable_groups,
            use_pallas=use_pallas)


def _run_case(name, *, N, Cin, Cout, ksize, stride, padding, dilation,
              groups, deformable_groups, H, W, seed):
    key = jax.random.PRNGKey(seed)
    kx, koff, kparam = jax.random.split(key, 3)
    KH = KW = ksize
    Ho = (H + 2 * padding - (dilation * (KH - 1) + 1)) // stride + 1
    Wo = (W + 2 * padding - (dilation * (KW - 1) + 1)) // stride + 1

    x = jax.random.normal(kx, (N, Cin, H, W), dtype=jnp.float32)
    offset_blob = 0.5 * jax.random.normal(
        koff, (N, 3 * deformable_groups * KH * KW, Ho, Wo), dtype=jnp.float32)

    mod = ModulatedDeformConvPackPallas(
        Cin, Cout, ksize, stride, padding, offset=offset_blob,
        dilation=dilation, groups=groups, deformable_groups=deformable_groups,
        key=kparam)

    out = jax.block_until_ready(mod(x, use_pallas=True))
    assert out.shape == (N, Cout, Ho, Wo), (name, out.shape)

    out_ref = jax.block_until_ready(mod(x, use_pallas=False))
    # Pallas path streams bf16 operands (f32 accumulation); ref is an f32 matmul on
    # the same bf16 cols, so the tolerance only has to cover bf16 weight rounding.
    assert bool(jnp.allclose(out, out_ref, rtol=5e-2, atol=5e-2)), \
        f"{name}: mismatch vs JAX reference"


if __name__ == "__main__":
    # small base case
    _run_case("base", N=2, Cin=4, Cout=8, ksize=3, stride=1, padding=1, dilation=1,
              groups=1, deformable_groups=1, H=16, W=16, seed=0)
    # exercises grouped conv, P (Ho*Wo) not a multiple of 128, and Cout/group padding
    _run_case("grouped", N=1, Cin=8, Cout=12, ksize=3, stride=1, padding=1, dilation=1,
              groups=2, deformable_groups=1, H=14, W=14, seed=1)
    print("KERNEL_OK")
</pallas_src>

<mosaic_0001>
module attributes {stable_mosaic.version = 11 : i64} {
  func.func @kernel(%arg0: i32, %arg1: i32, %arg2: i32, %arg3: i32, %arg4: memref<1x1x36x256xbf16, #tpu.memory_space<vmem>>, %arg5: memref<1x16x36xbf16, #tpu.memory_space<vmem>>, %arg6: memref<1x16x1xf32, #tpu.memory_space<vmem>>, %arg7: memref<1x1x16x256xf32, #tpu.memory_space<vmem>>) attributes {dimension_semantics = [#tpu.dimension_semantics<parallel>, #tpu.dimension_semantics<parallel>, #tpu.dimension_semantics<parallel>, #tpu.dimension_semantics<arbitrary>], iteration_bounds = array<i64: 2, 1, 1, 1>, scalar_prefetch = 0 : i64, scratch_operands = 0 : i64, tpu.core_type = #tpu.core_type<tc>, window_params = [{transform_indices = @transform_0, window_bounds = array<i64: 1, 1, 36, 256>}, {transform_indices = @transform_1, window_bounds = array<i64: 1, 16, 36>}, {transform_indices = @transform_2, window_bounds = array<i64: 1, 16, 1>}, {transform_indices = @transform_3, window_bounds = array<i64: 1, 1, 16, 256>}]} {
    %c0_i32 = arith.constant 0 : i32
    %0 = arith.cmpi eq, %arg3, %c0_i32 : i32
    %1 = arith.extui %0 : i1 to i32
    %c0_i32_0 = arith.constant 0 : i32
    %2 = arith.cmpi ne, %1, %c0_i32_0 : i32
    scf.if %2 {
      %cst_17 = arith.constant 0.000000e+00 : f32
      %17 = vector.broadcast %cst_17 : f32 to vector<16x256xf32>
      %c0_18 = arith.constant 0 : index
      %c0_19 = arith.constant 0 : index
      %c0_20 = arith.constant 0 : index
      %c0_21 = arith.constant 0 : index
      %18 = vector.load %arg7[%c0_18, %c0_19, %c0_20, %c0_21] : memref<1x1x16x256xf32, #tpu.memory_space<vmem>>, vector<1x1x16x256xf32>
      %19 = vector.shape_cast %18 : vector<1x1x16x256xf32> to vector<16x256xf32>
      %20 = vector.shape_cast %17 : vector<16x256xf32> to vector<1x1x16x256xf32>
      tpu.vector_store %arg7[%c0_18, %c0_19, %c0_20, %c0_21], %20 {strides = array<i32>} : memref<1x1x16x256xf32, #tpu.memory_space<vmem>>, vector<1x1x16x256xf32>,
    } else {
    }
    %c0 = arith.constant 0 : index
    %c0_1 = arith.constant 0 : index
    %c0_2 = arith.constant 0 : index
    %3 = vector.load %arg5[%c0, %c0_1, %c0_2] : memref<1x16x36xbf16, #tpu.memory_space<vmem>>, vector<1x16x36xbf16>
    %4 = vector.shape_cast %3 : vector<1x16x36xbf16> to vector<16x36xbf16>
    %c0_3 = arith.constant 0 : index
    %c0_4 = arith.constant 0 : index
    %c0_5 = arith.constant 0 : index
    %c0_6 = arith.constant 0 : index
    %5 = vector.load %arg7[%c0_3, %c0_4, %c0_5, %c0_6] : memref<1x1x16x256xf32, #tpu.memory_space<vmem>>, vector<1x1x16x256xf32>
    %6 = vector.shape_cast %5 : vector<1x1x16x256xf32> to vector<16x256xf32>
    %c0_7 = arith.constant 0 : index
    %c0_8 = arith.constant 0 : index
    %c0_9 = arith.constant 0 : index
    %c0_10 = arith.constant 0 : index
    %7 = vector.load %arg4[%c0_7, %c0_8, %c0_9, %c0_10] : memref<1x1x36x256xbf16, #tpu.memory_space<vmem>>, vector<1x1x36x256xbf16>
    %8 = vector.shape_cast %7 : vector<1x1x36x256xbf16> to vector<36x256xbf16>
    %cst = arith.constant dense<0.000000e+00> : vector<16x256xf32>
    %9 = tpu.matmul %4, %8, %cst {dimension_numbers = #tpu.dot_dimension_numbers<[1], [0], [0], [1], [0, 0, 1, 1], [], []>} : vector<16x36xbf16>, vector<36x256xbf16>, vector<16x256xf32> -> vector<16x256xf32>
    %10 = arith.addf %6, %9 : vector<16x256xf32>
    %c0_11 = arith.constant 0 : index
    %c0_12 = arith.constant 0 : index
    %c0_13 = arith.constant 0 : index
    %c0_14 = arith.constant 0 : index
    %11 = vector.load %arg7[%c0_11, %c0_12, %c0_13, %c0_14] : memref<1x1x16x256xf32, #tpu.memory_space<vmem>>, vector<1x1x16x256xf32>
    %12 = vector.shape_cast %11 : vector<1x1x16x256xf32> to vector<16x256xf32>
    %13 = vector.shape_cast %10 : vector<16x256xf32> to vector<1x1x16x256xf32>
    tpu.vector_store %arg7[%c0_11, %c0_12, %c0_13, %c0_14], %13 {strides = array<i32>} : memref<1x1x16x256xf32, #tpu.memory_space<vmem>>, vector<1x1x16x256xf32>,
    %c0_i32_15 = arith.constant 0 : i32
    %14 = arith.cmpi eq, %arg3, %c0_i32_15 : i32
    %15 = arith.extui %14 : i1 to i32
    %c0_i32_16 = arith.constant 0 : i32
    %16 = arith.cmpi ne, %15, %c0_i32_16 : i32
    scf.if %16 {
      %c0_17 = arith.constant 0 : index
      %c0_18 = arith.constant 0 : index
      %c0_19 = arith.constant 0 : index
      %c0_20 = arith.constant 0 : index
      %17 = vector.load %arg7[%c0_17, %c0_18, %c0_19, %c0_20] : memref<1x1x16x256xf32, #tpu.memory_space<vmem>>, vector<1x1x16x256xf32>
      %18 = vector.shape_cast %17 : vector<1x1x16x256xf32> to vector<16x256xf32>
      %c0_21 = arith.constant 0 : index
      %c0_22 = arith.constant 0 : index
      %c0_23 = arith.constant 0 : index
      %19 = vector.load %arg6[%c0_21, %c0_22, %c0_23] : memref<1x16x1xf32, #tpu.memory_space<vmem>>, vector<1x16x1xf32>
      %20 = vector.shape_cast %19 : vector<1x16x1xf32> to vector<16x1xf32>
      %21 = vector.broadcast %20 : vector<16x1xf32> to vector<16x256xf32>
      %22 = arith.addf %18, %21 : vector<16x256xf32>
      %c0_24 = arith.constant 0 : index
      %c0_25 = arith.constant 0 : index
      %c0_26 = arith.constant 0 : index
      %c0_27 = arith.constant 0 : index
      %23 = vector.load %arg7[%c0_24, %c0_25, %c0_26, %c0_27] : memref<1x1x16x256xf32, #tpu.memory_space<vmem>>, vector<1x1x16x256xf32>
      %24 = vector.shape_cast %23 : vector<1x1x16x256xf32> to vector<16x256xf32>
      %25 = vector.shape_cast %22 : vector<16x256xf32> to vector<1x1x16x256xf32>
      tpu.vector_store %arg7[%c0_24, %c0_25, %c0_26, %c0_27], %25 {strides = array<i32>} : memref<1x1x16x256xf32, #tpu.memory_space<vmem>>, vector<1x1x16x256xf32>,
    } else {
    }
    return
  }
  func.func @transform_0(%arg0: i32, %arg1: i32, %arg2: i32, %arg3: i32) -> (i32, i32, i32, i32) {
    %c0_i32 = arith.constant 0 : i32
    return %arg0, %arg1, %arg3, %arg2 : i32, i32, i32, i32
  }
  func.func @transform_1(%arg0: i32, %arg1: i32, %arg2: i32, %arg3: i32) -> (i32, i32, i32) {
    %c0_i32 = arith.constant 0 : i32
    %c0_i32_0 = arith.constant 0 : i32
    %c0_i32_1 = arith.constant 0 : i32
    return %arg1, %c0_i32, %c0_i32_0 : i32, i32, i32
  }
  func.func @transform_2(%arg0: i32, %arg1: i32, %arg2: i32, %arg3: i32) -> (i32, i32, i32) {
    %c0_i32 = arith.constant 0 : i32
    %c0_i32_0 = arith.constant 0 : i32
    %c0_i32_1 = arith.constant 0 : i32
    return %arg1, %c0_i32, %c0_i32_0 : i32, i32, i32
  }
  func.func @transform_3(%arg0: i32, %arg1: i32, %arg2: i32, %arg3: i32) -> (i32, i32, i32, i32) {
    %c0_i32 = arith.constant 0 : i32
    %c0_i32_0 = arith.constant 0 : i32
    return %arg0, %arg1, %c0_i32, %arg2 : i32, i32, i32, i32
  }
}

</mosaic_0001>

<llo_original>
// kernel: tpu_custom_call.1
$region0: #{tpu_custom_call.1}
  #allocation0 [shape = 'u32[]', space=smem, size = 0x4, offset = 0x4, fixed_abs, tag = 'smem constant byte address 0x4 - core index']
  #allocation1 [shape = 'u32[144,128]{1,0:T(1,128)}', space=vmem, size = 0x12000, scoped, tag = 'internal scratch']
  %s0 = inlined_call_operand.vmem [shape: bf16[2,1,36,256], index: 0, kind: input, shape index: {}]
  %s1 = inlined_call_operand.vmem [shape: bf16[1,16,36], index: 1, kind: input, shape index: {}]
  %s2 = inlined_call_operand.vmem [shape: f32[1,16,1], index: 2, kind: input, shape index: {}]
  %s3 = inlined_call_operand.hbm [shape: f32[2,1,16,256], index: 3, kind: output, shape index: {}]
  %s4 = sld [smem:[#allocation0]]
  $region53: #{tpu_custom_call.1} parent=0
    _
  %s6 = ssub.s32 1, %s4
  %s7 = scalar_select 0, %s6, %s4
  $region1: #{tpu_custom_call.1} parent=0
    #allocation2 [shape = 'u8[32768]{0}', space=vmem, size = 0x8000, scoped, tag = 'output window, operand 0']
    #allocation3 [shape = 's32[2]{0}', space=sflag, size = 0x8, scoped, tag = 'scoped memory for tpu_custom_call.1']
    %8 = vsyncpa [#allocation3], 0
    %s9 = scalar_lea.sflag [#allocation3], 1
    %10 = vsyncpa %s9, 0
    loop: start=0, step=1, limit=4
    $region2: #{tpu_custom_call.1} parent=1 // loop_pre_header
      _
    $region3: #{tpu_custom_call.1} parent=1 // loop_header
      %s12 = sphi 0, %s16
      %p13 = scmp.ge.s32.totalorder %s12, 4
      %s19 = sphi 0, %s45
      %s20 = sphi 0, %s41
      %s21 = sphi 0, %s37
      %s22 = sphi 0, %s33
      %s23 = sphi 0, %s19
      %s24 = sphi 0, %s20
      %s25 = sphi 0, %s21
      %s26 = sphi 0, %s22
      %s27 = sphi 0, %s23
      %s28 = sphi 0, %s24
      %s29 = sphi 0, %s25
      %s30 = sphi 0, %s26
      %s54 = sphi 0, %s56
      %s57 = sphi 0, %s54
      %s58 = sphi 0, %s57
      %s74 = sphi 0, %s58
      %s80 = sphi 0, %s82
      %s83 = sphi 0, %s80
      %s84 = sphi 0, %s83
      %s100 = sphi 0, %s84
      %s106 = sphi 0, %s108
      %s109 = sphi 0, %s106
      %s110 = sphi 0, %s109
      %s126 = sphi 0, %s110
      %s136 = sphi 0, %s138
      %s139 = sphi 0, %s136
      %s140 = sphi 0, %s139
      %s156 = sphi 0, %s140
    $region4: #{tpu_custom_call.1} parent=1 // loop_header_branch
      %15 = sbr.rel (%p13) target = $region8
    $region5: #{tpu_custom_call.1} parent=1 // loop_body
      %s17 = ssub.s32 %s12, 1
      %s18 = ssub.s32 %s12, 2
      %s31 = sadd.s32 1, %s22
      %p32 = scmp.ge.s32.totalorder %s31, 1
      %s33 = scalar_select %p32, 0, %s31
      %s34 = sadd.s32 1, %s21
      %s35 = scalar_select %p32, %s34, %s21
      %p36 = scmp.ge.s32.totalorder %s35, 1
      %s37 = scalar_select %p36, 0, %s35
      %s38 = sadd.s32 1, %s20
      %s39 = scalar_select %p36, %s38, %s20
      %p40 = scmp.ge.s32.totalorder %s39, 1
      %s41 = scalar_select %p40, 0, %s39
      %s42 = sadd.s32 1, %s19
      %s43 = scalar_select %p40, %s42, %s19
      %p44 = scmp.ge.s32.totalorder %s43, 2
      %s45 = scalar_select %p44, 0, %s43
      %s46 = ssub.s32 %s19, %s45
      %s47 = ssub.s32 %s20, %s41
      %s48 = sor.u32 %s46, %s47
      %s49 = ssub.s32 %s22, %s33
      %s50 = sor.u32 %s48, %s49
      %s51 = ssub.s32 %s21, %s37
      %s52 = sor.u32 %s50, %s51
      %p53 = scmp.eq.s32.totalorder %s52, 0
      %s55 = sadd.s32 %s54, 1
      %s56 = scalar_select %p53, %s54, %s55
      %p59 = pneg %p53
      %p60 = scmp.eq.s32.totalorder %s12, 1
      %p61 = por %p59, %p60
      %p62 = scmp.ne.s32.totalorder %s54, %s57
      %p63 = scmp.eq.s32.totalorder %s12, 0
      %p64 = por %p62, %p63
      %p65 = scmp.ne.s32.totalorder %s54, %s57
      %p66 = scmp.eq.s32.totalorder %s17, 1
      %p67 = por %p65, %p66
      %p68 = scmp.ne.s32.totalorder %s57, %s58
      %p69 = scmp.eq.s32.totalorder %s17, 0
      %p70 = por %p68, %p69
      %p71 = scmp.ne.s32.totalorder %s57, %s58
      %p72 = scmp.eq.s32.totalorder %s18, 1
      %p73 = por %p71, %p72
      %p75 = scmp.ne.s32.totalorder %s58, %s74
      %p76 = scmp.eq.s32.totalorder %s18, 0
      %p77 = por %p75, %p76
      %s78 = ssub.s32 %s20, %s41
      %p79 = scmp.eq.s32.totalorder %s78, 0
      %s81 = sadd.s32 %s80, 1
      %s82 = scalar_select %p79, %s80, %s81
      %p85 = pneg %p79
      %p86 = scmp.eq.s32.totalorder %s12, 1
      %p87 = por %p85, %p86
      %p88 = scmp.ne.s32.totalorder %s80, %s83
      %p89 = scmp.eq.s32.totalorder %s12, 0
      %p90 = por %p88, %p89
      %p91 = scmp.ne.s32.totalorder %s80, %s83
      %p92 = scmp.eq.s32.totalorder %s17, 1
      %p93 = por %p91, %p92
      %p94 = scmp.ne.s32.totalorder %s83, %s84
      %p95 = scmp.eq.s32.totalorder %s17, 0
      %p96 = por %p94, %p95
      %p97 = scmp.ne.s32.totalorder %s83, %s84
      %p98 = scmp.eq.s32.totalorder %s18, 1
      %p99 = por %p97, %p98
      %p101 = scmp.ne.s32.totalorder %s84, %s100
      %p102 = scmp.eq.s32.totalorder %s18, 0
      %p103 = por %p101, %p102
      %s104 = ssub.s32 %s20, %s41
      %p105 = scmp.eq.s32.totalorder %s104, 0
      %s107 = sadd.s32 %s106, 1
      %s108 = scalar_select %p105, %s106, %s107
      %p111 = pneg %p105
      %p112 = scmp.eq.s32.totalorder %s12, 1
      %p113 = por %p111, %p112
      %p114 = scmp.ne.s32.totalorder %s106, %s109
      %p115 = scmp.eq.s32.totalorder %s12, 0
      %p116 = por %p114, %p115
      %p117 = scmp.ne.s32.totalorder %s106, %s109
      %p118 = scmp.eq.s32.totalorder %s17, 1
      %p119 = por %p117, %p118
      %p120 = scmp.ne.s32.totalorder %s109, %s110
      %p121 = scmp.eq.s32.totalorder %s17, 0
      %p122 = por %p120, %p121
      %p123 = scmp.ne.s32.totalorder %s109, %s110
      %p124 = scmp.eq.s32.totalorder %s18, 1
      %p125 = por %p123, %p124
      %p127 = scmp.ne.s32.totalorder %s110, %s126
      %p128 = scmp.eq.s32.totalorder %s18, 0
      %p129 = por %p127, %p128
      %s130 = ssub.s32 %s19, %s45
      %s131 = ssub.s32 %s20, %s41
      %s132 = sor.u32 %s130, %s131
      %s133 = ssub.s32 %s21, %s37
      %s134 = sor.u32 %s132, %s133
      %p135 = scmp.eq.s32.totalorder %s134, 0
      %s137 = sadd.s32 %s136, 1
      %s138 = scalar_select %p135, %s136, %s137
      %p141 = pneg %p135
      %p142 = scmp.eq.s32.totalorder %s12, 1
      %p143 = por %p141, %p142
      %p144 = scmp.ne.s32.totalorder %s136, %s139
      %p145 = scmp.eq.s32.totalorder %s12, 0
      %p146 = por %p144, %p145
      %p147 = scmp.ne.s32.totalorder %s136, %s139
      %p148 = scmp.eq.s32.totalorder %s17, 1
      %p149 = por %p147, %p148
      %p150 = scmp.ne.s32.totalorder %s139, %s140
      %p151 = scmp.eq.s32.totalorder %s17, 0
      %p152 = por %p150, %p151
      %p153 = scmp.ne.s32.totalorder %s139, %s140
      %p154 = scmp.eq.s32.totalorder %s18, 1
      %p155 = por %p153, %p154
      %p157 = scmp.ne.s32.totalorder %s140, %s156
      %p158 = scmp.eq.s32.totalorder %s18, 0
      %p159 = por %p157, %p158
      %p160 = scmp.le.s32.totalorder 1, %s12
      %p161 = scmp.lt.s32.totalorder %s12, 3
      %p162 = pnand %p160, %p161
      %p163 = pneg %p162
      // Predicated region
      $region9: #{tpu_custom_call.1} parent=5 // pred_check
        _
      $region10: #{tpu_custom_call.1} parent=5 // pred_check_branch
        %165 = sbr.rel (%p162) target = $region12
      $region11: #{tpu_custom_call.1} parent=5 // pred_region
        %s166 = ssub.s32 %s12, 1
        // Predicated region
        $region13: #{tpu_custom_call.1} parent=11 // pred_check
          %p167 = pneg %p96
        $region14: #{tpu_custom_call.1} parent=11 // pred_check_branch
          %169 = sbr.rel (%p167) target = $region16
        $region15: #{tpu_custom_call.1} parent=11 // pred_region
          %p170 = scmp.lt.s32.totalorder %s24, 0
          %s171 = scalar_select %p170, %s24, 0
          %s172 = smul.addr %s171, 2
          %s173 = smul.addr %s172, 4
          %s174 = scalar_lea.vmem %s1, %s173
        $region16: #{tpu_custom_call.1} parent=11 // pred_fallthru
          _
        // Predicated region
        $region17: #{tpu_custom_call.1} parent=11 // pred_check
          %p175 = pneg %p122
        $region18: #{tpu_custom_call.1} parent=11 // pred_check_branch
          %177 = sbr.rel (%p175) target = $region20
        $region19: #{tpu_custom_call.1} parent=11 // pred_region
          %p178 = scmp.lt.s32.totalorder %s24, 0
          %s179 = scalar_select %p178, %s24, 0
          %s180 = smul.addr %s179, 2
          %s181 = smul.addr %s180, 8
          %s182 = scalar_lea.vmem %s2, %s181
        $region20: #{tpu_custom_call.1} parent=11 // pred_fallthru
          _
      $region12: #{tpu_custom_call.1} parent=5 // pred_fallthru
        _
      %p183 = scmp.lt.s32.totalorder %s12, 2
      // Predicated region
      $region21: #{tpu_custom_call.1} parent=5 // pred_check
        %p184 = pneg %p183
      $region22: #{tpu_custom_call.1} parent=5 // pred_check_branch
        %186 = sbr.rel (%p184) target = $region24
      $region23: #{tpu_custom_call.1} parent=5 // pred_region
        // Predicated region
        $region25: #{tpu_custom_call.1} parent=23 // pred_check
          %p187 = pneg %p64
        $region26: #{tpu_custom_call.1} parent=23 // pred_check_branch
          %189 = sbr.rel (%p187) target = $region28
        $region27: #{tpu_custom_call.1} parent=23 // pred_region
          %s190 = smul.u32 5, %s22
          %s191 = smul.u32 2, %s21
          %p192 = scmp.lt.s32.totalorder %s19, 1
          %s193 = scalar_select %p192, %s19, 1
          %p194 = scmp.lt.s32.totalorder %s20, 0
          %s195 = scalar_select %p194, %s20, 0
          %p196 = scmp.lt.s32.totalorder %s190, 4
          %s197 = scalar_select %p196, %s190, 4
          %p198 = scmp.lt.s32.totalorder %s191, 1
          %s199 = scalar_select %p198, %s191, 1
          %s200 = smul.addr %s197, 2
          %s201 = sadd.s32 %s199, %s200
          %s202 = smul.addr %s195, 10
          %s203 = sadd.s32 %s201, %s202
          %s204 = smul.addr %s193, 10
          %s205 = sadd.s32 %s203, %s204
          %s206 = smul.addr %s205, 4
          %s207 = scalar_lea.vmem %s0, %s206
          %s208 = smul.u32 5, %s22
          %s209 = smul.u32 2, %s21
        $region28: #{tpu_custom_call.1} parent=23 // pred_fallthru
          _
      $region24: #{tpu_custom_call.1} parent=5 // pred_fallthru
        _
      %p210 = scmp.le.s32.totalorder 1, %s12
      %p211 = scmp.lt.s32.totalorder %s12, 3
      %p212 = pnand %p210, %p211
      %p213 = pneg %p212
      // Predicated region
      $region29: #{tpu_custom_call.1} parent=5 // pred_check
        _
      $region30: #{tpu_custom_call.1} parent=5 // pred_check_branch
        %215 = sbr.rel (%p212) target = $region32
      $region31: #{tpu_custom_call.1} parent=5 // pred_region
        %s216 = ssub.s32 %s12, 1
        %s217 = smul.u32 5, %s26
        %s218 = smul.u32 2, %s25
        %p219 = scmp.lt.s32.totalorder %s23, 1
        %s220 = scalar_select %p219, %s23, 1
        %p221 = scmp.lt.s32.totalorder %s24, 0
        %s222 = scalar_select %p221, %s24, 0
        %p223 = scmp.lt.s32.totalorder %s217, 4
        %s224 = scalar_select %p223, %s217, 4
        %p225 = scmp.lt.s32.totalorder %s218, 1
        %s226 = scalar_select %p225, %s218, 1
        %s227 = smul.addr %s224, 2
        %s228 = sadd.s32 %s226, %s227
        %s229 = smul.addr %s222, 10
        %s230 = sadd.s32 %s228, %s229
        %s231 = smul.addr %s220, 10
        %s232 = sadd.s32 %s230, %s231
        %s233 = smul.addr %s232, 4
        %s234 = scalar_lea.vmem %s0, %s233
        %p235 = pneg %p70
        %p236 = pneg %p67
        %p237 = scmp.lt.s32.totalorder %s24, 0
        %s238 = scalar_select %p237, %s24, 0
        %s239 = smul.addr %s238, 2
        %s240 = smul.addr %s239, 4
        %s241 = scalar_lea.vmem %s1, %s240
        %p242 = pneg %p96
        %p243 = pneg %p93
        %p244 = scmp.lt.s32.totalorder %s24, 0
        %s245 = scalar_select %p244, %s24, 0
        %s246 = smul.addr %s245, 2
        %s247 = smul.addr %s246, 8
        %s248 = scalar_lea.vmem %s2, %s247
        %p249 = pneg %p122
        %p250 = pneg %p119
        %p251 = pneg %p152
        %p252 = pneg %p149
        %s253 = sand.u32 %s139, 1
        %s254 = scalar_lea.sflag [#allocation3], %s253
        %s255 = sand.u32 %s139, 1
        %s256 = smul.addr %s255, 32
        %s257 = scalar_lea.vmem [#allocation2], %s256
        %s258 = smul.u32 5, %s26
        %s259 = smul.u32 2, %s25
        %p260 = scmp.lt.s32.totalorder %s23, 1
        %s261 = scalar_select %p260, %s23, 1
        %p262 = scmp.lt.s32.totalorder %s24, 0
        %s263 = scalar_select %p262, %s24, 0
        %p264 = scmp.lt.s32.totalorder %s258, 4
        %s265 = scalar_select %p264, %s258, 4
        %p266 = scmp.lt.s32.totalorder %s259, 1
        %s267 = scalar_select %p266, %s259, 1
        %s268 = smul.addr %s265, 2
        %s269 = sadd.s32 %s267, %s268
        %s270 = smul.addr %s263, 10
        %s271 = sadd.s32 %s269, %s270
        %s272 = smul.addr %s261, 10
        %s273 = sadd.s32 %s271, %s272
        %s274 = smul.addr %s273, 4
        %s275 = scalar_lea.vmem %s0, %s274
        %s276 = smul.u32 5, %s26
        %s277 = smul.u32 2, %s25
        %p278 = scmp.lt.s32.totalorder %s24, 0
        %s279 = scalar_select %p278, %s24, 0
        %s280 = smul.addr %s279, 2
        %s281 = smul.addr %s280, 4
        %s282 = scalar_lea.vmem %s1, %s281
        %p283 = scmp.lt.s32.totalorder %s24, 0
        %s284 = scalar_select %p283, %s24, 0
        %s285 = smul.addr %s284, 2
        %s286 = smul.addr %s285, 8
        %s287 = scalar_lea.vmem %s2, %s286
        %s288 = smul.u32 2, %s25
        %p290 = scmp.eq.s32.totalorder %s26, 0
        // Predicated region
        $region33: #{tpu_custom_call.1} parent=31 // pred_check
          %p291 = pneg %p290
        $region34: #{tpu_custom_call.1} parent=31 // pred_check_branch
          %293 = sbr.rel (%p291) target = $region36
        $region35: #{tpu_custom_call.1} parent=31 // pred_region
          %294 = vst [vmem:[%s257] sm:$0xff] 0.0
          %295 = vst [vmem:[%s257 + $0x8] sm:$0xff] 0.0
          %296 = vst [vmem:[%s257 + $0x10] sm:$0xff] 0.0
          %297 = vst [vmem:[%s257 + $0x18] sm:$0xff] 0.0
        $region36: #{tpu_custom_call.1} parent=31 // pred_fallthru
          _
        %v298 = vld [vmem:[%s282] sm:$0xf]
        %v299 = vld [vmem:[%s282 + $0x4] sm:$0xf]
        %v300 = vld [vmem:[%s257] sm:$0xff]
        %v301 = vld [vmem:[%s257 + $0x8] sm:$0xff]
        %v302 = vld [vmem:[%s257 + $0x10] sm:$0xff]
        %v303 = vld [vmem:[%s257 + $0x18] sm:$0xff]
        %v304 = vld [vmem:[%s275] sm:$0xff]
        %v305 = vld [vmem:[%s275 + $0x8] sm:$0xff]
        %v306 = vld [vmem:[%s275 + $0x10] sm:$0xff]
        %v307 = vld [vmem:[%s275 + $0x18] sm:$0xff]
        %v308 = vld [vmem:[%s275 + $0x20] sm:$0x33]
        %v311 = vunpack.c.l.b16 %v298
        %v312 = vunpack.c.l.b16 %v299
        %v313 = vpack.c.b16 %v312, %v311
        %v319 = vunpack.c.l.b16 %v304
        %v320 = vunpack.c.h.b16 %v304
        %v321 = vunpack.c.l.b16 %v305
        %v322 = vunpack.c.h.b16 %v305
        %v323 = vunpack.c.l.b16 %v306
        %v324 = vunpack.c.h.b16 %v306
        %v325 = vunpack.c.l.b16 %v307
        %v326 = vunpack.c.h.b16 %v307
        %v327 = vunpack.c.l.b16 %v308
        %v328 = vunpack.c.h.b16 %v308
        %v329 = vpack.c.b16 %v321, %v319
        %v330 = vpack.c.b16 %v322, %v320
        %v331 = vpack.c.b16 %v325, %v323
        %v332 = vpack.c.b16 %v326, %v324
        %v333 = vpack.c.b16 %v327, %v327
        %v334 = vpack.c.b16 %v328, %v328
        %vm339 = vcmask 293888
        %v341 = vsel %vm339, %v313, 0
        %vm343 = vcmask 1041408
        %v345 = vsel %vm343, %v333, 0
        %v348 = vsel %vm343, %v334, 0
        %350 = vmatprep.subr.bf16.mxu0 %v330
        %351 = vmatpush1.bf16.msra.mxu0 %v329
        %352 = vmatprep.subr.bf16.mxu0 %v332
        %353 = vmatpush1.bf16.msra.mxu0 %v331
        %354 = vmatprep.subr.bf16.mxu0 %v348
        %355 = vmatpush1.bf16.msra.mxu0 %v345
        %356 = vmatprep.subr.bf16.mxu0 0
        %357 = vmatpush1.bf16.msra.mxu0 0
        %358 = vmatprep.subr.bf16.mxu0 0
        %359 = vmatpush1.bf16.msra.mxu0 0
        %360 = vmatprep.subr.bf16.mxu0 0
        %361 = vmatpush1.bf16.msra.mxu0 0
        %362 = vmatprep.subr.bf16.mxu0 0
        %363 = vmatpush1.bf16.msra.mxu0 0
        %364 = vmatprep.subr.bf16.mxu0 0
        %365 = vmatpush1.bf16.msra.mxu0 0
        %366 = vmatprep.subr.bf16.mxu0 0
        %367 = vmatpush1.bf16.msra.mxu0 0
        %368 = vmatprep.subr.bf16.mxu0 0
        %369 = vmatpush1.bf16.msra.mxu0 0
        %370 = vmatprep.subr.bf16.mxu0 0
        %371 = vmatpush1.bf16.msra.mxu0 0
        %372 = vmatprep.subr.bf16.mxu0 0
        %373 = vmatpush1.bf16.msra.mxu0 0
        %374 = vmatprep.subr.bf16.mxu0 0
        %375 = vmatpush1.bf16.msra.mxu0 0
        %376 = vmatprep.subr.bf16.mxu0 0
        %377 = vmatpush1.bf16.msra.mxu0 0
        %378 = vmatprep.subr.bf16.mxu0 0
        %379 = vmatpush1.bf16.msra.mxu0 0
        %380 = vmatprep.subr.bf16.mxu0 0
        %381 = vmatpush1.bf16.msra.mxu0 0
        %382 = vmatprep.mubr.bf16.mxu0 0
        %383 = vmatmul.mubr.bf16.gmra.mrb[0].mxu0 %v341
        %v384 = vpop.f32.mrb[0].mxu0
        %v385 = vadd.f32 0.0, %v384
        %v386 = vpop.f32.mrb[0].mxu0
        %v387 = vadd.f32 0.0, %v386
        %v388 = vpop.f32.mrb[0].mxu0
        %v389 = vadd.f32 0.0, %v388
        %v390 = vpop.f32.mrb[0].mxu0
        %v391 = vadd.f32 0.0, %v390
        %392 = vdwg.mxu0
        %v393 = vadd.f32 %v300, %v385
        %v394 = vadd.f32 %v301, %v387
        %v395 = vadd.f32 %v302, %v389
        %v396 = vadd.f32 %v303, %v391
        %397 = vst [vmem:[%s257] sm:$0xff] %v393
        %398 = vst [vmem:[%s257 + $0x8] sm:$0xff] %v394
        %399 = vst [vmem:[%s257 + $0x10] sm:$0xff] %v395
        %400 = vst [vmem:[%s257 + $0x18] sm:$0xff] %v396
        // Predicated region
        $region37: #{tpu_custom_call.1} parent=31 // pred_check
          %p401 = pneg %p290
        $region38: #{tpu_custom_call.1} parent=31 // pred_check_branch
          %403 = sbr.rel (%p401) target = $region40
        $region39: #{tpu_custom_call.1} parent=31 // pred_region
          %v404 = vld [vmem:[%s257] sm:$0xff]
          %v405 = vld [vmem:[%s257 + $0x8] sm:$0xff]
          %v406 = vld [vmem:[%s257 + $0x10] sm:$0xff]
          %v407 = vld [vmem:[%s257 + $0x18] sm:$0xff]
          %v408 = vld [vmem:[%s287] sm:$0xff]
          %v409 = vld [vmem:[%s287 + $0x8] sm:$0xff]
          %411 = vset.pattern.permute.xlu0 0
          %412 = vperm.xlu0 %411, %v408
          %v413 = vpop.permute.xlu0 %412
          %416 = vset.pattern.permute.xlu0 0
          %417 = vperm.xlu0 %416, %v409
          %v418 = vpop.permute.xlu0 %417
          %v420 = vadd.f32 %v404, %v413
          %v421 = vadd.f32 %v405, %v413
          %v422 = vadd.f32 %v406, %v418
          %v423 = vadd.f32 %v407, %v418
          %424 = vst [vmem:[%s257] sm:$0xff] %v420
          %425 = vst [vmem:[%s257 + $0x8] sm:$0xff] %v421
          %426 = vst [vmem:[%s257 + $0x10] sm:$0xff] %v422
          %427 = vst [vmem:[%s257 + $0x18] sm:$0xff] %v423
        $region40: #{tpu_custom_call.1} parent=31 // pred_fallthru
          _
        %s428 = sand.u32 %s139, 1
        %s429 = scalar_lea.sflag [#allocation3], %s428
        %s430 = sand.u32 %s139, 1
        %s431 = smul.addr %s430, 32
        %s432 = scalar_lea.vmem [#allocation2], %s431
        // Predicated region
        $region41: #{tpu_custom_call.1} parent=31 // pred_check
          %p433 = pneg %p149
        $region42: #{tpu_custom_call.1} parent=31 // pred_check_branch
          %435 = sbr.rel (%p433) target = $region44
        $region43: #{tpu_custom_call.1} parent=31 // pred_region
          %s436 = smul.u32 2, %s25
          %s438 = ssub.s32 512, 512
          %439 = vsyncadd %s429, %s438
          %s440 = smul.addr %s24, 4
          %s441 = sadd.s32 %s436, %s440
          %s442 = smul.addr %s23, 4
          %s443 = sadd.s32 %s441, %s442
          %s444 = smul.addr %s443, 128
          %s445 = scalar_lea.hbm %s3, %s444
          %s446 = sshll.u32 %s432, 4
          %s447 = int_to_ptr.vmem [resolvable:$true] %s446
          %452 = dma.vmem_to_hbm [thread:$0]  %s447, 512, %s445, %s429, 256, 256, 16
        $region44: #{tpu_custom_call.1} parent=31 // pred_fallthru
          _
      $region32: #{tpu_custom_call.1} parent=5 // pred_fallthru
        _
      %p453 = scmp.le.s32.totalorder 2, %s12
      // Predicated region
      $region45: #{tpu_custom_call.1} parent=5 // pred_check
        %p454 = pneg %p453
      $region46: #{tpu_custom_call.1} parent=5 // pred_check_branch
        %456 = sbr.rel (%p454) target = $region48
      $region47: #{tpu_custom_call.1} parent=5 // pred_region
        %s457 = ssub.s32 %s12, 2
        // Predicated region
        $region49: #{tpu_custom_call.1} parent=47 // pred_check
          %p458 = pneg %p155
        $region50: #{tpu_custom_call.1} parent=47 // pred_check_branch
          %460 = sbr.rel (%p458) target = $region52
        $region51: #{tpu_custom_call.1} parent=47 // pred_region
          %s461 = sand.u32 %s140, 1
          %s462 = scalar_lea.sflag [#allocation3], %s461
          %s463 = sand.u32 %s140, 1
          %s464 = smul.addr %s463, 32
          %s465 = scalar_lea.vmem [#allocation2], %s464
          %466 = dma.done %s462, 512
        $region52: #{tpu_custom_call.1} parent=47 // pred_fallthru
          _
      $region48: #{tpu_custom_call.1} parent=5 // pred_fallthru
        _
    $region6: #{tpu_custom_call.1} parent=1 // loop_footer
      %s16 = sadd.s32 1, %s12
    $region7: #{tpu_custom_call.1} parent=1 // loop_footer_branch
      %11 = sbr.rel target = $region3
    $region8: #{tpu_custom_call.1} parent=1 // loop_exit
      _
    %467 = vsyncpa [#allocation3], 1
    %s468 = scalar_lea.sflag [#allocation3], 1
    %469 = vsyncpa %s468, 1

</llo_original>
